<compile_context>
chip_gen: v6e
topology: v6e:2x2x1
jax: 0.10.0
libtpu: 0.0.40
codegen_flags: <defaults>
</compile_context>

<pallas_src>
import jax
import jax.numpy as jnp
from jax.experimental import pallas as pl
from jax.experimental.pallas import tpu as pltpu


def _round_up(x: int, m: int) -> int:
    return ((x + m - 1) // m) * m


def _pick_tile(padded_dim: int, cap: int, align: int) -> int:
    """Largest tile (multiple of `align`, <= cap) minimizing round_up(padded_dim, tile)."""
    best_t, best_total = align, _round_up(padded_dim, align)
    t = align
    limit = min(cap, padded_dim)
    while t <= limit:
        total = _round_up(padded_dim, t)
        if total < best_total or (total == best_total and t > best_t):
            best_t, best_total = t, total
        t += align
    return best_t


def _vmem_budget_bytes() -> int:
    """~Half of physical per-core VMEM: 64 MiB on v5e/v6e (128 MiB), 32 MiB on v7x (64 MiB)."""
    cap = 128 * 1024 * 1024
    try:
        cap = int(getattr(pltpu.get_tpu_info(), "vmem_capacity_bytes", cap))
    except Exception:
        pass
    return int(min(64 * 1024 * 1024, max(16 * 1024 * 1024, cap // 2)))


def _linear_kernel(x_ref, w_ref, o_ref):
    # Grid = (M tiles, N tiles, K tiles); K (last) is the reduction axis.
    # o_ref's block index is invariant along K -> it stays resident in VMEM, so
    # accumulate into it directly (no scratch, no final tile copy).
    @pl.when(pl.program_id(2) == 0)
    def _init():
        o_ref[...] = jnp.zeros_like(o_ref)

    # x tile: (tm, tk); w tile: (tk, tn) -- standard (M,K)x(K,N) MXU feed.
    o_ref[...] += jnp.dot(x_ref[...], w_ref[...], preferred_element_type=jnp.float32)


def prepare_weight(weight, *, tn_cap=512, tk_cap=2048, use_bf16=False):
    """One-time parameter prep: transpose nn.Linear's (out_dim, in_dim) weight to a
    lane-dense (K, N) operand, pad to tile multiples, optionally cast to bf16.
    Amortized across every forward call (the weight is constant)."""
    output_dim, input_dim = weight.shape
    n_base = _round_up(output_dim, 128)
    k_base = _round_up(input_dim, 128)
    tn = _pick_tile(n_base, tn_cap, 128)
    tk = _pick_tile(k_base, tk_cap, 128)
    n_pad = _round_up(n_base, tn)
    k_pad = _round_up(k_base, tk)

    w_kn = weight.T  # (input_dim, output_dim): contraction along dim 0 -> no per-tile transpose
    if (k_pad, n_pad) != w_kn.shape:
        w_kn = jnp.pad(w_kn, ((0, k_pad - input_dim), (0, n_pad - output_dim)))
    compute_dtype = jnp.dtype(jnp.bfloat16) if use_bf16 else jnp.dtype(jnp.float32)
    w_kn = w_kn.astype(compute_dtype)

    return dict(w_kn=w_kn, tn=tn, tk=tk, input_dim=input_dim,
                output_dim=output_dim, compute_dtype=compute_dtype)


def transfer_logistic_regression_forward(x, params, *, tm_cap=512):
    """y = x @ weight.T (no bias). `params` comes from prepare_weight()."""
    batch, input_dim = x.shape
    assert input_dim == params["input_dim"], "input_dim mismatch with prepared weight"
    w_kn = params["w_kn"]
    tn, tk = params["tn"], params["tk"]
    compute_dtype = params["compute_dtype"]
    output_dim = params["output_dim"]
    k_pad, n_pad = w_kn.shape
    in_bytes = jnp.dtype(compute_dtype).itemsize

    # M tile: sublane-aligned (8 for f32, 16 for bf16); adaptive to limit overshoot.
    m_align = 16 if compute_dtype == jnp.bfloat16 else 8
    m_base = _round_up(batch, m_align)
    tm = _pick_tile(m_base, tm_cap, m_align)
    m_pad = _round_up(m_base, tm)

    # v7x megacore: expose >= 2 tiles on the parallel axes when splittable.
    if (m_pad // tm) * (n_pad // tn) == 1:
        if tm % (2 * m_align) == 0:
            tm //= 2
        elif tn % 256 == 0:
            tn //= 2

    # Defensive VMEM fit: double-buffered inputs + double-buffered f32 output tile.
    budget = _vmem_budget_bytes()

    def est(tm_, tn_, tk_):
        return 2 * tm_ * tk_ * in_bytes + 2 * tk_ * tn_ * in_bytes + 2 * tm_ * tn_ * 4

    while est(tm, tn, tk) > budget and tk % 256 == 0:
        tk //= 2
    while est(tm, tn, tk) > budget and tn % 256 == 0:
        tn //= 2
    while est(tm, tn, tk) > budget and tm % (2 * m_align) == 0:
        tm //= 2

    x_p = x
    if (m_pad, k_pad) != x.shape or x.dtype != compute_dtype:
        # Zero-padded K columns contribute nothing; padded M rows are sliced away below.
        # TODO(synk): for latency-critical serving, choose tile-aligned batch/input_dim up
        # front so this per-call pad+cast pass disappears.
        x_p = jnp.pad(x, ((0, m_pad - batch), (0, k_pad - input_dim))).astype(compute_dtype)

    grid = (m_pad // tm, n_pad // tn, k_pad // tk)

    flops = 2 * m_pad * n_pad * k_pad
    bytes_accessed = (
        in_bytes * m_pad * k_pad * (n_pad // tn)     # x re-streamed once per N tile
        + in_bytes * k_pad * n_pad * (m_pad // tm)   # W re-streamed once per M tile
        + 4 * m_pad * n_pad                          # output written once
    )

    out_padded = pl.pallas_call(
        _linear_kernel,
        out_shape=jax.ShapeDtypeStruct((m_pad, n_pad), jnp.float32),
        grid=grid,
        in_specs=[
            pl.BlockSpec((tm, tk), lambda i, j, k: (i, k)),  # x tile
            pl.BlockSpec((tk, tn), lambda i, j, k: (k, j)),  # weight tile, (K, N) layout
        ],
        out_specs=pl.BlockSpec((tm, tn), lambda i, j, k: (i, j)),
        compiler_params=pltpu.CompilerParams(
            dimension_semantics=("parallel", "parallel", "arbitrary"),
            vmem_limit_bytes=budget,
        ),
        cost_estimate=pl.CostEstimate(
            flops=flops, transcendentals=0, bytes_accessed=bytes_accessed
        ),
    )(x_p, w_kn)

    return out_padded[:batch, :output_dim]


if __name__ == "__main__":
    key = jax.random.PRNGKey(0)
    kx, kw, kx2, kw2, kx3, kw3 = jax.random.split(key, 6)

    # 1) The module's small shapes: batch=8, input_dim=32, output_dim=16 (single tile).
    batch, input_dim, output_dim = 8, 32, 16
    x = jax.random.normal(kx, (batch, input_dim), dtype=jnp.float32)
    bound = 1.0 / float(input_dim) ** 0.5
    w = jax.random.uniform(kw, (output_dim, input_dim), jnp.float32,
                           minval=-bound, maxval=bound)
    params = prepare_weight(w)
    y = transfer_logistic_regression_forward(x, params)
    jax.block_until_ready(y)
    assert y.shape == (batch, output_dim)
    assert jnp.allclose(y, x @ w.T, atol=1e-5, rtol=1e-5)

    # 2) Multi-tile grid with K-axis accumulation (small caps force a (2,3,2) grid).
    b2, d_in2, d_out2 = 512, 768, 384
    x2 = jax.random.normal(kx2, (b2, d_in2), dtype=jnp.float32)
    w2 = jax.random.normal(kw2, (d_out2, d_in2), dtype=jnp.float32) * 0.02
    params2 = prepare_weight(w2, tn_cap=256, tk_cap=512)
    y2 = transfer_logistic_regression_forward(x2, params2, tm_cap=256)
    jax.block_until_ready(y2)
    assert y2.shape == (b2, d_out2)
    assert jnp.allclose(y2, x2 @ w2.T, atol=1e-3, rtol=1e-3)

    # 3) Opt-in bf16 feed (f32 MXU accumulation); compared against the bf16-cast reference.
    b3, d_in3, d_out3 = 128, 256, 256
    x3 = jax.random.normal(kx3, (b3, d_in3), dtype=jnp.float32)
    w3 = jax.random.normal(kw3, (d_out3, d_in3), dtype=jnp.float32) * 0.05
    params3 = prepare_weight(w3, use_bf16=True)
    y3 = transfer_logistic_regression_forward(x3, params3)
    jax.block_until_ready(y3)
    ref3 = (x3.astype(jnp.bfloat16).astype(jnp.float32)
            @ w3.T.astype(jnp.bfloat16).astype(jnp.float32))
    assert jnp.allclose(y3, ref3, atol=1e-2, rtol=1e-2)

    print("KERNEL_OK")
</pallas_src>

<mosaic_0001>
module attributes {stable_mosaic.version = 11 : i64} {
  func.func @_linear_kernel(%arg0: i32, %arg1: i32, %arg2: i32, %arg3: memref<8x128xf32, #tpu.memory_space<vmem>>, %arg4: memref<128x128xf32, #tpu.memory_space<vmem>>, %arg5: memref<8x128xf32, #tpu.memory_space<vmem>>) attributes {dimension_semantics = [#tpu.dimension_semantics<parallel>, #tpu.dimension_semantics<parallel>, #tpu.dimension_semantics<arbitrary>], iteration_bounds = array<i64: 1, 1, 1>, scalar_prefetch = 0 : i64, scratch_operands = 0 : i64, tpu.core_type = #tpu.core_type<tc>, window_params = [{transform_indices = @transform_0, window_bounds = array<i64: 8, 128>}, {transform_indices = @transform_1, window_bounds = array<i64: 128, 128>}, {transform_indices = @transform_2, window_bounds = array<i64: 8, 128>}]} {
    %c0_i32 = arith.constant 0 : i32
    %0 = arith.cmpi eq, %arg2, %c0_i32 : i32
    %1 = arith.extui %0 : i1 to i32
    %c0_i32_0 = arith.constant 0 : i32
    %2 = arith.cmpi ne, %1, %c0_i32_0 : i32
    scf.if %2 {
      %cst_8 = arith.constant 0.000000e+00 : f32
      %9 = vector.broadcast %cst_8 : f32 to vector<8x128xf32>
      %c0_9 = arith.constant 0 : index
      %c0_10 = arith.constant 0 : index
      %10 = vector.load %arg5[%c0_9, %c0_10] : memref<8x128xf32, #tpu.memory_space<vmem>>, vector<8x128xf32>
      tpu.vector_store %arg5[%c0_9, %c0_10], %9 {strides = array<i32>} : memref<8x128xf32, #tpu.memory_space<vmem>>, vector<8x128xf32>,
    } else {
    }
    %c0 = arith.constant 0 : index
    %c0_1 = arith.constant 0 : index
    %3 = vector.load %arg5[%c0, %c0_1] : memref<8x128xf32, #tpu.memory_space<vmem>>, vector<8x128xf32>
    %c0_2 = arith.constant 0 : index
    %c0_3 = arith.constant 0 : index
    %4 = vector.load %arg3[%c0_2, %c0_3] : memref<8x128xf32, #tpu.memory_space<vmem>>, vector<8x128xf32>
    %c0_4 = arith.constant 0 : index
    %c0_5 = arith.constant 0 : index
    %5 = vector.load %arg4[%c0_4, %c0_5] : memref<128x128xf32, #tpu.memory_space<vmem>>, vector<128x128xf32>
    %cst = arith.constant dense<0.000000e+00> : vector<8x128xf32>
    %6 = tpu.matmul %4, %5, %cst {dimension_numbers = #tpu.dot_dimension_numbers<[1], [0], [0], [1], [0, 0, 1, 1], [], []>} : vector<8x128xf32>, vector<128x128xf32>, vector<8x128xf32> -> vector<8x128xf32>
    %7 = arith.addf %3, %6 : vector<8x128xf32>
    %c0_6 = arith.constant 0 : index
    %c0_7 = arith.constant 0 : index
    %8 = vector.load %arg5[%c0_6, %c0_7] : memref<8x128xf32, #tpu.memory_space<vmem>>, vector<8x128xf32>
    tpu.vector_store %arg5[%c0_6, %c0_7], %7 {strides = array<i32>} : memref<8x128xf32, #tpu.memory_space<vmem>>, vector<8x128xf32>,
    return
  }
  func.func @transform_0(%arg0: i32, %arg1: i32, %arg2: i32) -> (i32, i32) {
    %c0_i32 = arith.constant 0 : i32
    return %arg0, %arg2 : i32, i32
  }
  func.func @transform_1(%arg0: i32, %arg1: i32, %arg2: i32) -> (i32, i32) {
    %c0_i32 = arith.constant 0 : i32
    return %arg2, %arg1 : i32, i32
  }
  func.func @transform_2(%arg0: i32, %arg1: i32, %arg2: i32) -> (i32, i32) {
    %c0_i32 = arith.constant 0 : i32
    return %arg0, %arg1 : i32, i32
  }
}

</mosaic_0001>

<llo_original>
// kernel: tpu_custom_call.1
$region0: #{tpu_custom_call.1}
  #allocation0 [shape = 'u32[]', space=smem, size = 0x4, offset = 0x4, fixed_abs, tag = 'smem constant byte address 0x4 - core index']
  #allocation1 [shape = 'u32[144,128]{1,0:T(1,128)}', space=vmem, size = 0x12000, scoped, tag = 'internal scratch']
  %s0 = inlined_call_operand.hbm [shape: f32[8,128], index: 0, kind: input, shape index: {}]
  %s1 = inlined_call_operand.hbm [shape: f32[128,128], index: 1, kind: input, shape index: {}]
  %s2 = inlined_call_operand.hbm [shape: f32[8,128], index: 2, kind: output, shape index: {}]
  %s3 = sld [smem:[#allocation0]]
  $region30: #{tpu_custom_call.1} parent=0
    _
  %s5 = ssub.s32 1, %s3
  %s6 = scalar_select 0, %s5, %s3
  $region1: #{tpu_custom_call.1} parent=0
    #allocation2 [shape = 'u8[4096]{0}', space=vmem, size = 0x1000, scoped, tag = 'input window, operand 0, single buffered']
    #allocation3 [shape = 's32[1]{0}', space=sflag, size = 0x4, scoped, tag = 'scoped memory for tpu_custom_call.1']
    #allocation4 [shape = 's32[1]{0}', space=sflag, size = 0x4, scoped, tag = 'scoped memory for tpu_custom_call.1']
    #allocation5 [shape = 'u8[65536]{0}', space=vmem, size = 0x10000, scoped, tag = 'input window, operand 1, single buffered']
    #allocation6 [shape = 's32[1]{0}', space=sflag, size = 0x4, scoped, tag = 'scoped memory for tpu_custom_call.1']
    #allocation7 [shape = 'u8[4096]{0}', space=vmem, size = 0x1000, scoped, tag = 'output window, operand 0, single buffered']
    %7 = vsyncpa [#allocation3], 0
    %8 = vsyncpa [#allocation6], 0
    %9 = vsyncpa [#allocation4], 0
    // Predicated region
    $region2: #{tpu_custom_call.1} parent=1 // pred_check
      _
    $region3: #{tpu_custom_call.1} parent=1 // pred_check_branch
      %11 = sbr.rel (0) target = $region5
    $region4: #{tpu_custom_call.1} parent=1 // pred_region
      %s13 = ssub.s32 128, 128
      %14 = vsyncadd [#allocation3], %s13
      %s16 = sshll.u32 [#allocation2], 4
      %s17 = int_to_ptr.vmem [resolvable:$true] %s16
      %19 = dma.hbm_to_vmem [thread:$0]  %s0, 128, %s17, [#allocation3]
    $region5: #{tpu_custom_call.1} parent=1 // pred_fallthru
      _
    // Predicated region
    $region6: #{tpu_custom_call.1} parent=1 // pred_check
      _
    $region7: #{tpu_custom_call.1} parent=1 // pred_check_branch
      %21 = sbr.rel (0) target = $region9
    $region8: #{tpu_custom_call.1} parent=1 // pred_region
      %s23 = ssub.s32 2048, 2048
      %24 = vsyncadd [#allocation6], %s23
      %s25 = sshll.u32 [#allocation5], 4
      %s26 = int_to_ptr.vmem [resolvable:$true] %s25
      %31 = dma.hbm_to_vmem [thread:$0]  %s1, 2048, %s26, [#allocation6], 128, 128, 8
    $region9: #{tpu_custom_call.1} parent=1 // pred_fallthru
      _
    // Predicated region
    $region10: #{tpu_custom_call.1} parent=1 // pred_check
      _
    $region11: #{tpu_custom_call.1} parent=1 // pred_check_branch
      %33 = sbr.rel (0) target = $region13
    $region12: #{tpu_custom_call.1} parent=1 // pred_region
      %34 = dma.done [#allocation3], 128
    $region13: #{tpu_custom_call.1} parent=1 // pred_fallthru
      _
    // Predicated region
    $region14: #{tpu_custom_call.1} parent=1 // pred_check
      _
    $region15: #{tpu_custom_call.1} parent=1 // pred_check_branch
      %36 = sbr.rel (0) target = $region17
    $region16: #{tpu_custom_call.1} parent=1 // pred_region
      %37 = dma.done [#allocation6], 2048
    $region17: #{tpu_custom_call.1} parent=1 // pred_fallthru
      _
    %p38 = scmp.eq.s32.totalorder 0, 0
    // Predicated region
    $region18: #{tpu_custom_call.1} parent=1 // pred_check
      %p39 = pneg %p38
    $region19: #{tpu_custom_call.1} parent=1 // pred_check_branch
      %41 = sbr.rel (%p39) target = $region21
    $region20: #{tpu_custom_call.1} parent=1 // pred_region
      %42 = vst [vmem:[#allocation7] sm:$0xff] 0.0
    $region21: #{tpu_custom_call.1} parent=1 // pred_fallthru
      _
    %v43 = vld [vmem:[#allocation7] sm:$0xff]
    %v44 = vld [vmem:[#allocation2] sm:$0xff]
    %v45 = vld [vmem:[#allocation5] sm:$0xff]
    %v46 = vld [vmem:[#allocation5 + $0x8] sm:$0xff]
    %v47 = vld [vmem:[#allocation5 + $0x10] sm:$0xff]
    %v48 = vld [vmem:[#allocation5 + $0x18] sm:$0xff]
    %v49 = vld [vmem:[#allocation5 + $0x20] sm:$0xff]
    %v50 = vld [vmem:[#allocation5 + $0x28] sm:$0xff]
    %v51 = vld [vmem:[#allocation5 + $0x30] sm:$0xff]
    %v52 = vld [vmem:[#allocation5 + $0x38] sm:$0xff]
    %v53 = vld [vmem:[#allocation5 + $0x40] sm:$0xff]
    %v54 = vld [vmem:[#allocation5 + $0x48] sm:$0xff]
    %v55 = vld [vmem:[#allocation5 + $0x50] sm:$0xff]
    %v56 = vld [vmem:[#allocation5 + $0x58] sm:$0xff]
    %v57 = vld [vmem:[#allocation5 + $0x60] sm:$0xff]
    %v58 = vld [vmem:[#allocation5 + $0x68] sm:$0xff]
    %v59 = vld [vmem:[#allocation5 + $0x70] sm:$0xff]
    %v60 = vld [vmem:[#allocation5 + $0x78] sm:$0xff]
    %61 = vmatprep.subr.mxu0 0.0
    %62 = vmatpush1.msra.mxu0 %v60
    %63 = vmatprep.subr.mxu0 0.0
    %64 = vmatpush1.msra.mxu0 %v59
    %65 = vmatprep.subr.mxu0 0.0
    %66 = vmatpush1.msra.mxu0 %v58
    %67 = vmatprep.subr.mxu0 0.0
    %68 = vmatpush1.msra.mxu0 %v57
    %69 = vmatprep.subr.mxu0 0.0
    %70 = vmatpush1.msra.mxu0 %v56
    %71 = vmatprep.subr.mxu0 0.0
    %72 = vmatpush1.msra.mxu0 %v55
    %73 = vmatprep.subr.mxu0 0.0
    %74 = vmatpush1.msra.mxu0 %v54
    %75 = vmatprep.subr.mxu0 0.0
    %76 = vmatpush1.msra.mxu0 %v53
    %77 = vmatprep.subr.mxu0 0.0
    %78 = vmatpush1.msra.mxu0 %v52
    %79 = vmatprep.subr.mxu0 0.0
    %80 = vmatpush1.msra.mxu0 %v51
    %81 = vmatprep.subr.mxu0 0.0
    %82 = vmatpush1.msra.mxu0 %v50
    %83 = vmatprep.subr.mxu0 0.0
    %84 = vmatpush1.msra.mxu0 %v49
    %85 = vmatprep.subr.mxu0 0.0
    %86 = vmatpush1.msra.mxu0 %v48
    %87 = vmatprep.subr.mxu0 0.0
    %88 = vmatpush1.msra.mxu0 %v47
    %89 = vmatprep.subr.mxu0 0.0
    %90 = vmatpush1.msra.mxu0 %v46
    %91 = vmatprep.subr.mxu0 0.0
    %92 = vmatpush1.msra.mxu0 %v45
    %93 = vmatprep.subr.mxu0 0.0
    %94 = vmatpush2.msra.mxu0 0.0
    %95 = vmatprep.subr.mxu0 0.0
    %96 = vmatpush2.msra.mxu0 0.0
    %97 = vmatprep.subr.mxu0 0.0
    %98 = vmatpush2.msra.mxu0 0.0
    %99 = vmatprep.subr.mxu0 0.0
    %100 = vmatpush2.msra.mxu0 0.0
    %101 = vmatprep.subr.mxu0 0.0
    %102 = vmatpush2.msra.mxu0 0.0
    %103 = vmatprep.subr.mxu0 0.0
    %104 = vmatpush2.msra.mxu0 0.0
    %105 = vmatprep.subr.mxu0 0.0
    %106 = vmatpush2.msra.mxu0 0.0
    %107 = vmatprep.subr.mxu0 0.0
    %108 = vmatpush2.msra.mxu0 0.0
    %109 = vmatprep.subr.mxu0 0.0
    %110 = vmatpush2.msra.mxu0 0.0
    %111 = vmatprep.subr.mxu0 0.0
    %112 = vmatpush2.msra.mxu0 0.0
    %113 = vmatprep.subr.mxu0 0.0
    %114 = vmatpush2.msra.mxu0 0.0
    %115 = vmatprep.subr.mxu0 0.0
    %116 = vmatpush2.msra.mxu0 0.0
    %117 = vmatprep.subr.mxu0 0.0
    %118 = vmatpush2.msra.mxu0 0.0
    %119 = vmatprep.subr.mxu0 0.0
    %120 = vmatpush2.msra.mxu0 0.0
    %121 = vmatprep.subr.mxu0 0.0
    %122 = vmatpush2.msra.mxu0 0.0
    %123 = vmatprep.subr.mxu0 0.0
    %124 = vmatpush2.msra.mxu0 0.0
    %125 = vmatprep.mubr.f32.mxu0 0.0
    %126 = vmatmul.mubr.f32.gmra.mxu0 %v44
    %v127 = vpop.f32.mrf.mxu0
    %v128 = vadd.f32 0.0, %v127
    %v129 = vpop.f32.mrf.mxu0
    %130 = vdwg.mxu0
    %v131 = vadd.f32 %v43, %v128
    %132 = vst [vmem:[#allocation7] sm:$0xff] %v131
    // Predicated region
    $region22: #{tpu_custom_call.1} parent=1 // pred_check
      _
    $region23: #{tpu_custom_call.1} parent=1 // pred_check_branch
      %134 = sbr.rel (0) target = $region25
    $region24: #{tpu_custom_call.1} parent=1 // pred_region
      %s136 = ssub.s32 128, 128
      %137 = vsyncadd [#allocation4], %s136
      %s139 = sshll.u32 [#allocation7], 4
      %s140 = int_to_ptr.vmem [resolvable:$true] %s139
      %142 = dma.vmem_to_hbm [thread:$0]  %s140, 128, %s2, [#allocation4]
    $region25: #{tpu_custom_call.1} parent=1 // pred_fallthru
      _
    // Predicated region
    $region26: #{tpu_custom_call.1} parent=1 // pred_check
      _
    $region27: #{tpu_custom_call.1} parent=1 // pred_check_branch
      %144 = sbr.rel (0) target = $region29
    $region28: #{tpu_custom_call.1} parent=1 // pred_region
      %145 = dma.done [#allocation4], 128
    $region29: #{tpu_custom_call.1} parent=1 // pred_fallthru
      _
    %146 = vsyncpa [#allocation3], 1
    %147 = vsyncpa [#allocation6], 1
    %148 = vsyncpa [#allocation4], 1

</llo_original>
